<compile_context>
chip_gen: v7x
topology: tpu7x:2x2x1
jax: 0.10.0
libtpu: 0.0.40
codegen_flags: <defaults>
</compile_context>

<pallas_src>
import jax
import jax.numpy as jnp
from jax.experimental import pallas as pl
from jax.experimental.pallas import tpu as pltpu


_COMPUTE_DTYPE = jnp.bfloat16          # MXU input dtype; accumulation is f32.
_VMEM_LIMIT = 64 * 1024 * 1024         # explicit scoped-VMEM cap (headroom on v7x).


def _pick_tile(n, candidates):
    """Largest aligned tile that evenly divides n; fall back to full extent."""
    for c in candidates:
        if n >= c and n % c == 0:
            return c
    return n


def _kv_proj_kernel(x_ref, w1_ref, b1_ref, w2k_ref, b2k_ref, w2v_ref, b2v_ref,
                    k_ref, v_ref):
    # x_ref: (TM, D) f32; w*: bf16; b*: (1, D) f32; k_ref/v_ref: (TM, D) bf16.
    x = x_ref[...].astype(_COMPUTE_DTYPE)
    h = jnp.dot(x, w1_ref[...], preferred_element_type=jnp.float32) + b1_ref[...]
    h = jnp.maximum(h, 0.0).astype(_COMPUTE_DTYPE)        # ReLU (f32), bf16 for MXU
    # Two independent matmuls instead of one (TM, 2D) matmul + slice:
    k = jnp.dot(h, w2k_ref[...], preferred_element_type=jnp.float32) + b2k_ref[...]
    v = jnp.dot(h, w2v_ref[...], preferred_element_type=jnp.float32) + b2v_ref[...]
    k_ref[...] = k.astype(k_ref.dtype)
    v_ref[...] = v.astype(v_ref.dtype)


def _attn_kernel(k_ref, v_ref, dtl_ref, out_ref, attn_ref):
    # k_ref: (1, TL, D) bf16; v_ref: (1, L, D) bf16 (full sequence);
    # dtl_ref: (D, L) bf16; out_ref: (1, TL, D) f32; attn_ref: (1, TL, L).
    logits = jnp.dot(k_ref[0], dtl_ref[...],
                     preferred_element_type=jnp.float32)          # (TL, L) f32

    # TODO(synk): optional `mask` argument (masked_fill with -inf before the
    # softmax) is not wired in; this implements the mask=None reference path.

    # Numerically stable softmax, kept in f32; normalize with the EUP
    # reciprocal (approx) + a VALU multiply instead of a full divide.
    m = jnp.max(logits, axis=-1, keepdims=True)
    e = jnp.exp(logits - m)
    s = jnp.sum(e, axis=-1, keepdims=True)
    attn = e * pl.reciprocal(s, approx=True)                      # (TL, L) f32

    out = jnp.dot(attn.astype(_COMPUTE_DTYPE), v_ref[0],
                  preferred_element_type=jnp.float32)             # (TL, D) f32
    out_ref[0] = out.astype(out_ref.dtype)
    attn_ref[0] = attn.astype(attn_ref.dtype)


def synthetic_attention(x, params, *, attention_dtype=jnp.float32):
    """x: [B, L, D] float32. Returns {'output': [B, L, D] f32,
    'attention': [B, L, L] attention_dtype}."""
    B, L, D = x.shape
    M = B * L

    dtl_full = params["D_to_L"]
    max_len = dtl_full.shape[1]
    assert L <= max_len, f"L={L} exceeds max_length={max_len}"

    # --- weights: cast once to bf16 in the wrapper; split w2 into k/v halves.
    w1 = params["w1"].astype(_COMPUTE_DTYPE)
    b1 = params["b1"].reshape(1, D).astype(jnp.float32)
    w2_k = params["w2"][:, :D].astype(_COMPUTE_DTYPE)
    w2_v = params["w2"][:, D:].astype(_COMPUTE_DTYPE)
    b2_k = params["b2"][:D].reshape(1, D).astype(jnp.float32)
    b2_v = params["b2"][D:].reshape(1, D).astype(jnp.float32)

    # D_to_L[:, :L]: let the BlockSpec window select the first L columns when
    # the shape is layout-aligned (no XLA slice copy); otherwise slice once.
    if L == max_len or (L % 128 == 0 and D % 8 == 0):
        dtl = dtl_full.astype(_COMPUTE_DTYPE)
    else:
        dtl = dtl_full[:, :L].astype(_COMPUTE_DTYPE)

    # ---------------- stage 1: kv projection over folded B*L rows ----------
    TM = _pick_tile(M, (512, 256, 128))
    x2d = x.reshape(M, D)
    const = lambda i: (0, 0)
    k2d, v2d = pl.pallas_call(
        _kv_proj_kernel,
        out_shape=(jax.ShapeDtypeStruct((M, D), _COMPUTE_DTYPE),
                   jax.ShapeDtypeStruct((M, D), _COMPUTE_DTYPE)),
        grid_spec=pltpu.PrefetchScalarGridSpec(
            num_scalar_prefetch=0,
            grid=(M // TM,),
            in_specs=[
                pl.BlockSpec((TM, D), lambda i: (i, 0)),   # x rows
                pl.BlockSpec((D, D), const),               # w1
                pl.BlockSpec((1, D), const),               # b1
                pl.BlockSpec((D, D), const),               # w2_k
                pl.BlockSpec((1, D), const),               # b2_k
                pl.BlockSpec((D, D), const),               # w2_v
                pl.BlockSpec((1, D), const),               # b2_v
            ],
            out_specs=[
                pl.BlockSpec((TM, D), lambda i: (i, 0)),   # k
                pl.BlockSpec((TM, D), lambda i: (i, 0)),   # v
            ],
        ),
        compiler_params=pltpu.CompilerParams(
            dimension_semantics=("parallel",),
            vmem_limit_bytes=_VMEM_LIMIT),
    )(x2d, w1, b1, w2_k, b2_k, w2_v, b2_v)

    k3d = k2d.reshape(B, L, D)
    v3d = v2d.reshape(B, L, D)

    # ---------------- stage 2: attention, tiled over (batch, query tile) ---
    TL = _pick_tile(L, (256, 128))
    out, attn = pl.pallas_call(
        _attn_kernel,
        out_shape=(jax.ShapeDtypeStruct((B, L, D), jnp.float32),
                   jax.ShapeDtypeStruct((B, L, L), attention_dtype)),
        grid_spec=pltpu.PrefetchScalarGridSpec(
            num_scalar_prefetch=0,
            grid=(B, L // TL),
            in_specs=[
                pl.BlockSpec((1, TL, D), lambda b, t: (b, t, 0)),   # k tile
                pl.BlockSpec((1, L, D), lambda b, t: (b, 0, 0)),    # full-seq v
                pl.BlockSpec((D, L), lambda b, t: (0, 0)),          # D_to_L[:, :L]
            ],
            out_specs=[
                pl.BlockSpec((1, TL, D), lambda b, t: (b, t, 0)),   # output
                pl.BlockSpec((1, TL, L), lambda b, t: (b, t, 0)),   # attention
            ],
        ),
        compiler_params=pltpu.CompilerParams(
            dimension_semantics=("parallel", "parallel"),
            vmem_limit_bytes=_VMEM_LIMIT),
    )(k3d, v3d, dtl)

    return {"output": out, "attention": attn}


def init_params(key, d_model, max_length):
    """Deterministic synthetic parameter init (shapes match the nn.Module)."""
    k1, k2, k3, k4, k5 = jax.random.split(key, 5)
    scale = 1.0 / jnp.sqrt(d_model)
    return {
        "w1": jax.random.uniform(k1, (d_model, d_model), jnp.float32, -scale, scale),
        "b1": jax.random.uniform(k2, (d_model,), jnp.float32, -scale, scale),
        "w2": jax.random.uniform(k3, (d_model, 2 * d_model), jnp.float32, -scale, scale),
        "b2": jax.random.uniform(k4, (2 * d_model,), jnp.float32, -scale, scale),
        # D_to_L = randn(d_model, max_length) * 0.01
        "D_to_L": jax.random.normal(k5, (d_model, max_length), jnp.float32) * 0.01,
    }


def reference(x, params):
    """Pure-JAX f32 reference of the PyTorch forward (mask=None)."""
    B, L, D = x.shape
    h = jnp.maximum(x @ params["w1"] + params["b1"], 0.0)
    kv = h @ params["w2"] + params["b2"]
    k, v = kv[..., :D], kv[..., D:]
    logits = jnp.einsum("bld,dk->blk", k, params["D_to_L"][:, :L])
    attn = jax.nn.softmax(logits, axis=-1)
    out = attn @ v
    return {"output": out, "attention": attn}


if __name__ == "__main__":
    B, L, D, MAX_LEN = 2, 8, 32, 16

    key = jax.random.PRNGKey(0)
    kx, kp = jax.random.split(key)
    x = jax.random.normal(kx, (B, L, D), jnp.float32)
    params = init_params(kp, D, MAX_LEN)

    result = synthetic_attention(x, params)
    jax.block_until_ready(result)

    ref = reference(x, params)
    # bf16 MXU inputs (f32 accumulation) -> loosened tolerances vs the f32 ref.
    assert jnp.allclose(result["output"], ref["output"], atol=5e-2, rtol=5e-2), (
        float(jnp.max(jnp.abs(result["output"] - ref["output"]))))
    assert jnp.allclose(result["attention"], ref["attention"], atol=2e-2, rtol=2e-2), (
        float(jnp.max(jnp.abs(result["attention"] - ref["attention"]))))

    print("KERNEL_OK")
</pallas_src>

<mosaic_0001>
module attributes {stable_mosaic.version = 11 : i64} {
  func.func @_kv_proj_kernel(%arg0: i32, %arg1: memref<16x32xf32, #tpu.memory_space<vmem>>, %arg2: memref<32x32xbf16, #tpu.memory_space<vmem>>, %arg3: memref<1x32xf32, #tpu.memory_space<vmem>>, %arg4: memref<32x32xbf16, #tpu.memory_space<vmem>>, %arg5: memref<1x32xf32, #tpu.memory_space<vmem>>, %arg6: memref<32x32xbf16, #tpu.memory_space<vmem>>, %arg7: memref<1x32xf32, #tpu.memory_space<vmem>>, %arg8: memref<16x32xbf16, #tpu.memory_space<vmem>>, %arg9: memref<16x32xbf16, #tpu.memory_space<vmem>>) attributes {dimension_semantics = [#tpu.dimension_semantics<parallel>], iteration_bounds = array<i64: 1>, scalar_prefetch = 0 : i64, scratch_operands = 0 : i64, tpu.core_type = #tpu.core_type<tc>, window_params = [{transform_indices = @transform_0, window_bounds = array<i64: 16, 32>}, {pipeline_mode = #tpu.pipeline_mode<synchronous>, transform_indices = @transform_1, window_bounds = array<i64: 32, 32>}, {pipeline_mode = #tpu.pipeline_mode<synchronous>, transform_indices = @transform_2, window_bounds = array<i64: 1, 32>}, {pipeline_mode = #tpu.pipeline_mode<synchronous>, transform_indices = @transform_3, window_bounds = array<i64: 32, 32>}, {pipeline_mode = #tpu.pipeline_mode<synchronous>, transform_indices = @transform_4, window_bounds = array<i64: 1, 32>}, {pipeline_mode = #tpu.pipeline_mode<synchronous>, transform_indices = @transform_5, window_bounds = array<i64: 32, 32>}, {pipeline_mode = #tpu.pipeline_mode<synchronous>, transform_indices = @transform_6, window_bounds = array<i64: 1, 32>}, {transform_indices = @transform_7, window_bounds = array<i64: 16, 32>}, {transform_indices = @transform_8, window_bounds = array<i64: 16, 32>}]} {
    %c0 = arith.constant 0 : index
    %c0_0 = arith.constant 0 : index
    %0 = vector.load %arg1[%c0, %c0_0] : memref<16x32xf32, #tpu.memory_space<vmem>>, vector<16x32xf32>
    %1 = arith.truncf %0 : vector<16x32xf32> to vector<16x32xbf16>
    %c0_1 = arith.constant 0 : index
    %c0_2 = arith.constant 0 : index
    %2 = vector.load %arg2[%c0_1, %c0_2] : memref<32x32xbf16, #tpu.memory_space<vmem>>, vector<32x32xbf16>
    %cst = arith.constant dense<0.000000e+00> : vector<16x32xf32>
    %3 = tpu.matmul %1, %2, %cst {dimension_numbers = #tpu.dot_dimension_numbers<[1], [0], [0], [1], [0, 0, 1, 1], [], []>} : vector<16x32xbf16>, vector<32x32xbf16>, vector<16x32xf32> -> vector<16x32xf32>
    %c0_3 = arith.constant 0 : index
    %c0_4 = arith.constant 0 : index
    %4 = vector.load %arg3[%c0_3, %c0_4] : memref<1x32xf32, #tpu.memory_space<vmem>>, vector<1x32xf32>
    %5 = vector.broadcast %4 : vector<1x32xf32> to vector<16x32xf32>
    %6 = arith.addf %3, %5 : vector<16x32xf32>
    %cst_5 = arith.constant 0.000000e+00 : f32
    %7 = vector.broadcast %cst_5 : f32 to vector<16x32xf32>
    %8 = arith.maximumf %6, %7 : vector<16x32xf32>
    %9 = arith.truncf %8 : vector<16x32xf32> to vector<16x32xbf16>
    %c0_6 = arith.constant 0 : index
    %c0_7 = arith.constant 0 : index
    %10 = vector.load %arg4[%c0_6, %c0_7] : memref<32x32xbf16, #tpu.memory_space<vmem>>, vector<32x32xbf16>
    %cst_8 = arith.constant dense<0.000000e+00> : vector<16x32xf32>
    %11 = tpu.matmul %9, %10, %cst_8 {dimension_numbers = #tpu.dot_dimension_numbers<[1], [0], [0], [1], [0, 0, 1, 1], [], []>} : vector<16x32xbf16>, vector<32x32xbf16>, vector<16x32xf32> -> vector<16x32xf32>
    %c0_9 = arith.constant 0 : index
    %c0_10 = arith.constant 0 : index
    %12 = vector.load %arg5[%c0_9, %c0_10] : memref<1x32xf32, #tpu.memory_space<vmem>>, vector<1x32xf32>
    %13 = vector.broadcast %12 : vector<1x32xf32> to vector<16x32xf32>
    %14 = arith.addf %11, %13 : vector<16x32xf32>
    %c0_11 = arith.constant 0 : index
    %c0_12 = arith.constant 0 : index
    %15 = vector.load %arg6[%c0_11, %c0_12] : memref<32x32xbf16, #tpu.memory_space<vmem>>, vector<32x32xbf16>
    %cst_13 = arith.constant dense<0.000000e+00> : vector<16x32xf32>
    %16 = tpu.matmul %9, %15, %cst_13 {dimension_numbers = #tpu.dot_dimension_numbers<[1], [0], [0], [1], [0, 0, 1, 1], [], []>} : vector<16x32xbf16>, vector<32x32xbf16>, vector<16x32xf32> -> vector<16x32xf32>
    %c0_14 = arith.constant 0 : index
    %c0_15 = arith.constant 0 : index
    %17 = vector.load %arg7[%c0_14, %c0_15] : memref<1x32xf32, #tpu.memory_space<vmem>>, vector<1x32xf32>
    %18 = vector.broadcast %17 : vector<1x32xf32> to vector<16x32xf32>
    %19 = arith.addf %16, %18 : vector<16x32xf32>
    %20 = arith.truncf %14 : vector<16x32xf32> to vector<16x32xbf16>
    %c0_16 = arith.constant 0 : index
    %c0_17 = arith.constant 0 : index
    %21 = vector.load %arg8[%c0_16, %c0_17] : memref<16x32xbf16, #tpu.memory_space<vmem>>, vector<16x32xbf16>
    tpu.vector_store %arg8[%c0_16, %c0_17], %20 {strides = array<i32>} : memref<16x32xbf16, #tpu.memory_space<vmem>>, vector<16x32xbf16>,
    %22 = arith.truncf %19 : vector<16x32xf32> to vector<16x32xbf16>
    %c0_18 = arith.constant 0 : index
    %c0_19 = arith.constant 0 : index
    %23 = vector.load %arg9[%c0_18, %c0_19] : memref<16x32xbf16, #tpu.memory_space<vmem>>, vector<16x32xbf16>
    tpu.vector_store %arg9[%c0_18, %c0_19], %22 {strides = array<i32>} : memref<16x32xbf16, #tpu.memory_space<vmem>>, vector<16x32xbf16>,
    return
  }
  func.func @transform_0(%arg0: i32) -> (i32, i32) {
    %c0_i32 = arith.constant 0 : i32
    %c0_i32_0 = arith.constant 0 : i32
    return %arg0, %c0_i32 : i32, i32
  }
  func.func @transform_1(%arg0: i32) -> (i32, i32) {
    %c0_i32 = arith.constant 0 : i32
    %c0_i32_0 = arith.constant 0 : i32
    %c0_i32_1 = arith.constant 0 : i32
    return %c0_i32, %c0_i32_0 : i32, i32
  }
  func.func @transform_2(%arg0: i32) -> (i32, i32) {
    %c0_i32 = arith.constant 0 : i32
    %c0_i32_0 = arith.constant 0 : i32
    %c0_i32_1 = arith.constant 0 : i32
    return %c0_i32, %c0_i32_0 : i32, i32
  }
  func.func @transform_3(%arg0: i32) -> (i32, i32) {
    %c0_i32 = arith.constant 0 : i32
    %c0_i32_0 = arith.constant 0 : i32
    %c0_i32_1 = arith.constant 0 : i32
    return %c0_i32, %c0_i32_0 : i32, i32
  }
  func.func @transform_4(%arg0: i32) -> (i32, i32) {
    %c0_i32 = arith.constant 0 : i32
    %c0_i32_0 = arith.constant 0 : i32
    %c0_i32_1 = arith.constant 0 : i32
    return %c0_i32, %c0_i32_0 : i32, i32
  }
  func.func @transform_5(%arg0: i32) -> (i32, i32) {
    %c0_i32 = arith.constant 0 : i32
    %c0_i32_0 = arith.constant 0 : i32
    %c0_i32_1 = arith.constant 0 : i32
    return %c0_i32, %c0_i32_0 : i32, i32
  }
  func.func @transform_6(%arg0: i32) -> (i32, i32) {
    %c0_i32 = arith.constant 0 : i32
    %c0_i32_0 = arith.constant 0 : i32
    %c0_i32_1 = arith.constant 0 : i32
    return %c0_i32, %c0_i32_0 : i32, i32
  }
  func.func @transform_7(%arg0: i32) -> (i32, i32) {
    %c0_i32 = arith.constant 0 : i32
    %c0_i32_0 = arith.constant 0 : i32
    return %arg0, %c0_i32 : i32, i32
  }
  func.func @transform_8(%arg0: i32) -> (i32, i32) {
    %c0_i32 = arith.constant 0 : i32
    %c0_i32_0 = arith.constant 0 : i32
    return %arg0, %c0_i32 : i32, i32
  }
}

</mosaic_0001>

<llo_original>
// kernel: tpu_custom_call.1
$region0: #{tpu_custom_call.1}
  #allocation0 [shape = 'u32[]', space=smem, size = 0x4, offset = 0x4, fixed_abs, tag = 'smem constant byte address 0x4 - core index']
  #allocation1 [shape = 'u32[144,128]{1,0:T(1,128)}', space=vmem, size = 0x12000, scoped, tag = 'internal scratch']
  %s0 = inlined_call_operand.hbm [shape: f32[16,32], index: 0, kind: input, shape index: {}]
  %s1 = inlined_call_operand.hbm [shape: bf16[32,32], index: 1, kind: input, shape index: {}]
  %s2 = inlined_call_operand.hbm [shape: f32[1,32], index: 2, kind: input, shape index: {}]
  %s3 = inlined_call_operand.hbm [shape: bf16[32,32], index: 3, kind: input, shape index: {}]
  %s4 = inlined_call_operand.hbm [shape: f32[1,32], index: 4, kind: input, shape index: {}]
  %s5 = inlined_call_operand.hbm [shape: bf16[32,32], index: 5, kind: input, shape index: {}]
  %s6 = inlined_call_operand.hbm [shape: f32[1,32], index: 6, kind: input, shape index: {}]
  %s7 = inlined_call_operand.hbm [shape: bf16[16,32], index: 7, kind: output, shape index: {0}]
  %s8 = inlined_call_operand.hbm [shape: bf16[16,32], index: 8, kind: output, shape index: {1}]
  %9 = xla_tuple %s7, %s8
  %s10 = sld [smem:[#allocation0]]
  $region74: #{tpu_custom_call.1} parent=0
    _
  %s12 = ssub.s32 1, %s10
  %s13 = scalar_select 0, %s12, %s10
  $region1: #{tpu_custom_call.1} parent=0
    #allocation2 [shape = 'u8[8192]{0}', space=vmem, size = 0x2000, scoped, tag = 'input window, operand 0, single buffered']
    #allocation3 [shape = 's32[1]{0}', space=sflag, size = 0x4, scoped, tag = 'scoped memory for tpu_custom_call.1']
    #allocation4 [shape = 's32[1]{0}', space=sflag, size = 0x4, scoped, tag = 'scoped memory for tpu_custom_call.1']
    #allocation5 [shape = 'u8[8192]{0}', space=vmem, size = 0x2000, scoped, tag = 'input window, operand 1, single buffered']
    #allocation6 [shape = 's32[1]{0}', space=sflag, size = 0x4, scoped, tag = 'scoped memory for tpu_custom_call.1']
    #allocation7 [shape = 'u8[512]{0}', space=vmem, size = 0x400, scoped, tag = 'input window, operand 2, single buffered']
    #allocation8 [shape = 'u8[8192]{0}', space=vmem, size = 0x2000, scoped, tag = 'input window, operand 3, single buffered']
    #allocation9 [shape = 's32[1]{0}', space=sflag, size = 0x4, scoped, tag = 'scoped memory for tpu_custom_call.1']
    #allocation10 [shape = 'u8[512]{0}', space=vmem, size = 0x400, scoped, tag = 'input window, operand 4, single buffered']
    #allocation11 [shape = 'u8[8192]{0}', space=vmem, size = 0x2000, scoped, tag = 'input window, operand 5, single buffered']
    #allocation12 [shape = 's32[1]{0}', space=sflag, size = 0x4, scoped, tag = 'scoped memory for tpu_custom_call.1']
    #allocation13 [shape = 'u8[512]{0}', space=vmem, size = 0x400, scoped, tag = 'input window, operand 6, single buffered']
    #allocation14 [shape = 'u8[4096]{0}', space=vmem, size = 0x1000, scoped, tag = 'output window, operand 0, single buffered']
    #allocation15 [shape = 'u8[4096]{0}', space=vmem, size = 0x1000, scoped, tag = 'output window, operand 1, single buffered']
    #allocation16 [shape = 's32[1]{0}', space=sflag, size = 0x4, scoped, tag = 'scoped memory for tpu_custom_call.1']
    %14 = vsyncpa [#allocation3], 0
    %15 = vsyncpa [#allocation6], 0
    %16 = vsyncpa [#allocation9], 0
    %17 = vsyncpa [#allocation12], 0
    %18 = vsyncpa [#allocation4], 0
    %19 = vsyncpa [#allocation16], 0
    // Predicated region
    $region2: #{tpu_custom_call.1} parent=1 // pred_check
      _
    $region3: #{tpu_custom_call.1} parent=1 // pred_check_branch
      %21 = sbr.rel (0) target = $region5
    $region4: #{tpu_custom_call.1} parent=1 // pred_region
      %s23 = ssub.s32 256, 256
      %24 = vsyncadd [#allocation3], %s23
      %s25 = sshll.u32 [#allocation2], 4
      %s26 = int_to_ptr.vmem [resolvable:$true] %s25
      %31 = dma.hbm_to_vmem [thread:$0]  %s0, 256, %s26, [#allocation3], 128, 128, 8
    $region5: #{tpu_custom_call.1} parent=1 // pred_fallthru
      _
    // Predicated region
    $region6: #{tpu_custom_call.1} parent=1 // pred_check
      _
    $region7: #{tpu_custom_call.1} parent=1 // pred_check_branch
      %33 = sbr.rel (0) target = $region9
    $region8: #{tpu_custom_call.1} parent=1 // pred_region
      %s35 = ssub.s32 256, 256
      %36 = vsyncadd [#allocation6], %s35
      %s37 = sshll.u32 [#allocation5], 4
      %s38 = int_to_ptr.vmem [resolvable:$true] %s37
      %43 = dma.hbm_to_vmem [thread:$0]  %s1, 256, %s38, [#allocation6], 64, 64, 4
    $region9: #{tpu_custom_call.1} parent=1 // pred_fallthru
      _
    // Predicated region
    $region10: #{tpu_custom_call.1} parent=1 // pred_check
      _
    $region11: #{tpu_custom_call.1} parent=1 // pred_check_branch
      %45 = sbr.rel (0) target = $region13
    $region12: #{tpu_custom_call.1} parent=1 // pred_region
      %s47 = ssub.s32 16, 16
      %48 = vsyncadd [#allocation6], %s47
      %s50 = sshll.u32 [#allocation7], 4
      %s51 = int_to_ptr.vmem [resolvable:$true] %s50
      %53 = dma.hbm_to_vmem [thread:$0]  %s2, 16, %s51, [#allocation6]
    $region13: #{tpu_custom_call.1} parent=1 // pred_fallthru
      _
    // Predicated region
    $region14: #{tpu_custom_call.1} parent=1 // pred_check
      _
    $region15: #{tpu_custom_call.1} parent=1 // pred_check_branch
      %55 = sbr.rel (0) target = $region17
    $region16: #{tpu_custom_call.1} parent=1 // pred_region
      %s57 = ssub.s32 256, 256
      %58 = vsyncadd [#allocation9], %s57
      %s59 = sshll.u32 [#allocation8], 4
      %s60 = int_to_ptr.vmem [resolvable:$true] %s59
      %65 = dma.hbm_to_vmem [thread:$0]  %s3, 256, %s60, [#allocation9], 64, 64, 4
    $region17: #{tpu_custom_call.1} parent=1 // pred_fallthru
      _
    // Predicated region
    $region18: #{tpu_custom_call.1} parent=1 // pred_check
      _
    $region19: #{tpu_custom_call.1} parent=1 // pred_check_branch
      %67 = sbr.rel (0) target = $region21
    $region20: #{tpu_custom_call.1} parent=1 // pred_region
      %s69 = ssub.s32 16, 16
      %70 = vsyncadd [#allocation9], %s69
      %s72 = sshll.u32 [#allocation10], 4
      %s73 = int_to_ptr.vmem [resolvable:$true] %s72
      %75 = dma.hbm_to_vmem [thread:$0]  %s4, 16, %s73, [#allocation9]
    $region21: #{tpu_custom_call.1} parent=1 // pred_fallthru
      _
    // Predicated region
    $region22: #{tpu_custom_call.1} parent=1 // pred_check
      _
    $region23: #{tpu_custom_call.1} parent=1 // pred_check_branch
      %77 = sbr.rel (0) target = $region25
    $region24: #{tpu_custom_call.1} parent=1 // pred_region
      %s79 = ssub.s32 256, 256
      %80 = vsyncadd [#allocation12], %s79
      %s81 = sshll.u32 [#allocation11], 4
      %s82 = int_to_ptr.vmem [resolvable:$true] %s81
      %87 = dma.hbm_to_vmem [thread:$0]  %s5, 256, %s82, [#allocation12], 64, 64, 4
    $region25: #{tpu_custom_call.1} parent=1 // pred_fallthru
      _
    // Predicated region
    $region26: #{tpu_custom_call.1} parent=1 // pred_check
      _
    $region27: #{tpu_custom_call.1} parent=1 // pred_check_branch
      %89 = sbr.rel (0) target = $region29
    $region28: #{tpu_custom_call.1} parent=1 // pred_region
      %s91 = ssub.s32 16, 16
      %92 = vsyncadd [#allocation12], %s91
      %s94 = sshll.u32 [#allocation13], 4
      %s95 = int_to_ptr.vmem [resolvable:$true] %s94
      %97 = dma.hbm_to_vmem [thread:$0]  %s6, 16, %s95, [#allocation12]
    $region29: #{tpu_custom_call.1} parent=1 // pred_fallthru
      _
    // Predicated region
    $region30: #{tpu_custom_call.1} parent=1 // pred_check
      _
    $region31: #{tpu_custom_call.1} parent=1 // pred_check_branch
      %99 = sbr.rel (0) target = $region33
    $region32: #{tpu_custom_call.1} parent=1 // pred_region
      %100 = dma.done [#allocation3], 256
    $region33: #{tpu_custom_call.1} parent=1 // pred_fallthru
      _
    // Predicated region
    $region34: #{tpu_custom_call.1} parent=1 // pred_check
      _
    $region35: #{tpu_custom_call.1} parent=1 // pred_check_branch
      %102 = sbr.rel (0) target = $region37
    $region36: #{tpu_custom_call.1} parent=1 // pred_region
      %103 = dma.done [#allocation6], 256
    $region37: #{tpu_custom_call.1} parent=1 // pred_fallthru
      _
    // Predicated region
    $region38: #{tpu_custom_call.1} parent=1 // pred_check
      _
    $region39: #{tpu_custom_call.1} parent=1 // pred_check_branch
      %105 = sbr.rel (0) target = $region41
    $region40: #{tpu_custom_call.1} parent=1 // pred_region
      %106 = dma.done [#allocation6], 16
    $region41: #{tpu_custom_call.1} parent=1 // pred_fallthru
      _
    // Predicated region
    $region42: #{tpu_custom_call.1} parent=1 // pred_check
      _
    $region43: #{tpu_custom_call.1} parent=1 // pred_check_branch
      %108 = sbr.rel (0) target = $region45
    $region44: #{tpu_custom_call.1} parent=1 // pred_region
      %109 = dma.done [#allocation9], 256
    $region45: #{tpu_custom_call.1} parent=1 // pred_fallthru
      _
    // Predicated region
    $region46: #{tpu_custom_call.1} parent=1 // pred_check
      _
    $region47: #{tpu_custom_call.1} parent=1 // pred_check_branch
      %111 = sbr.rel (0) target = $region49
    $region48: #{tpu_custom_call.1} parent=1 // pred_region
      %112 = dma.done [#allocation9], 16
    $region49: #{tpu_custom_call.1} parent=1 // pred_fallthru
      _
    // Predicated region
    $region50: #{tpu_custom_call.1} parent=1 // pred_check
      _
    $region51: #{tpu_custom_call.1} parent=1 // pred_check_branch
      %114 = sbr.rel (0) target = $region53
    $region52: #{tpu_custom_call.1} parent=1 // pred_region
      %115 = dma.done [#allocation12], 256
    $region53: #{tpu_custom_call.1} parent=1 // pred_fallthru
      _
    // Predicated region
    $region54: #{tpu_custom_call.1} parent=1 // pred_check
      _
    $region55: #{tpu_custom_call.1} parent=1 // pred_check_branch
      %117 = sbr.rel (0) target = $region57
    $region56: #{tpu_custom_call.1} parent=1 // pred_region
      %118 = dma.done [#allocation12], 16
    $region57: #{tpu_custom_call.1} parent=1 // pred_fallthru
      _
    %v120 = vld [vmem:[#allocation2] sm:$0xff]
    %v121 = vld [vmem:[#allocation2 + $0x8] sm:$0xff]
    %v122 = vpack.c.bf16 %v121, %v120
    %v123 = vld [vmem:[#allocation5] sm:$0xf]
    %v124 = vld [vmem:[#allocation5 + $0x4] sm:$0xf]
    %v125 = vld [vmem:[#allocation5 + $0x8] sm:$0xf]
    %v126 = vld [vmem:[#allocation5 + $0xc] sm:$0xf]
    %v127 = vld [vmem:[#allocation7] sm:$0x1]
    %v129 = vlaneseq
    %v130 = vshrl.u32 %v129, 7
    %v131 = vsub.s32 0, %v130
    %v132 = vrot.slane %v127, %v131
    %v138 = vunpack.c.l.b16 %v123
    %v139 = vunpack.c.l.b16 %v124
    %v140 = vunpack.c.l.b16 %v125
    %v141 = vunpack.c.l.b16 %v126
    %v142 = vpack.c.b16 %v139, %v138
    %v143 = vpack.c.b16 %v141, %v140
    %vm146 = vcmask 261120
    %v148 = vsel %vm146, %v122, 0
    %150 = vmatprep.subr.bf16.mxu0 0
    %151 = vmatpush1.bf16.msra.mxu0 %v142
    %152 = vmatprep.subr.bf16.mxu0 0
    %153 = vmatpush1.bf16.msra.mxu0 %v143
    %154 = vmatprep.subr.bf16.mxu0 0
    %155 = vmatpush1.bf16.msra.mxu0 0
    %156 = vmatprep.subr.bf16.mxu0 0
    %157 = vmatpush1.bf16.msra.mxu0 0
    %158 = vmatprep.subr.bf16.mxu0 0
    %159 = vmatpush1.bf16.msra.mxu0 0
    %160 = vmatprep.subr.bf16.mxu0 0
    %161 = vmatpush1.bf16.msra.mxu0 0
    %162 = vmatprep.subr.bf16.mxu0 0
    %163 = vmatpush1.bf16.msra.mxu0 0
    %164 = vmatprep.subr.bf16.mxu0 0
    %165 = vmatpush1.bf16.msra.mxu0 0
    %166 = vmatprep.subr.bf16.mxu0 0
    %167 = vmatpush1.bf16.msra.mxu0 0
    %168 = vmatprep.subr.bf16.mxu0 0
    %169 = vmatpush1.bf16.msra.mxu0 0
    %170 = vmatprep.subr.bf16.mxu0 0
    %171 = vmatpush1.bf16.msra.mxu0 0
    %172 = vmatprep.subr.bf16.mxu0 0
    %173 = vmatpush1.bf16.msra.mxu0 0
    %174 = vmatprep.subr.bf16.mxu0 0
    %175 = vmatpush1.bf16.msra.mxu0 0
    %176 = vmatprep.subr.bf16.mxu0 0
    %177 = vmatpush1.bf16.msra.mxu0 0
    %178 = vmatprep.subr.bf16.mxu0 0
    %179 = vmatpush1.bf16.msra.mxu0 0
    %180 = vmatprep.subr.bf16.mxu0 0
    %181 = vmatpush1.bf16.msra.mxu0 0
    %182 = vmatprep.mubr.bf16.mxu0 0
    %183 = vmatmul.mubr.bf16.gmra.mrb[0].mxu0 %v148
    %v184 = vpop.f32.mrb[0].mxu0
    %v185 = vadd.f32 %v132, %v184
    %v186 = vpop.f32.mrb[0].mxu0
    %v187 = vpop.f32.mrb[0].mxu0
    %v188 = vadd.f32 %v132, %v187
    %v189 = vpop.f32.mrb[0].mxu0
    %190 = vdwg.mxu0
    %v191 = vmax.f32 %v185, 0.0
    %v192 = vmax.f32 %v188, 0.0
    %v193 = vpack.c.bf16 %v192, %v191
    %v194 = vld [vmem:[#allocation8] sm:$0xf]
    %v195 = vld [vmem:[#allocation8 + $0x4] sm:$0xf]
    %v196 = vld [vmem:[#allocation8 + $0x8] sm:$0xf]
    %v197 = vld [vmem:[#allocation8 + $0xc] sm:$0xf]
    %v198 = vld [vmem:[#allocation10] sm:$0x1]
    %v200 = vlaneseq
    %v201 = vshrl.u32 %v200, 7
    %v202 = vsub.s32 0, %v201
    %v203 = vrot.slane %v198, %v202
    %v209 = vunpack.c.l.b16 %v194
    %v210 = vunpack.c.l.b16 %v195
    %v211 = vunpack.c.l.b16 %v196
    %v212 = vunpack.c.l.b16 %v197
    %v213 = vpack.c.b16 %v210, %v209
    %v214 = vpack.c.b16 %v212, %v211
    %v218 = vsel %vm146, %v193, 0
    %220 = vmatprep.subr.bf16.mxu0 0
    %221 = vmatpush1.bf16.msra.mxu0 %v213
    %222 = vmatprep.subr.bf16.mxu0 0
    %223 = vmatpush1.bf16.msra.mxu0 %v214
    %224 = vmatprep.subr.bf16.mxu0 0
    %225 = vmatpush1.bf16.msra.mxu0 0
    %226 = vmatprep.subr.bf16.mxu0 0
    %227 = vmatpush1.bf16.msra.mxu0 0
    %228 = vmatprep.subr.bf16.mxu0 0
    %229 = vmatpush1.bf16.msra.mxu0 0
    %230 = vmatprep.subr.bf16.mxu0 0
    %231 = vmatpush1.bf16.msra.mxu0 0
    %232 = vmatprep.subr.bf16.mxu0 0
    %233 = vmatpush1.bf16.msra.mxu0 0
    %234 = vmatprep.subr.bf16.mxu0 0
    %235 = vmatpush1.bf16.msra.mxu0 0
    %236 = vmatprep.subr.bf16.mxu0 0
    %237 = vmatpush1.bf16.msra.mxu0 0
    %238 = vmatprep.subr.bf16.mxu0 0
    %239 = vmatpush1.bf16.msra.mxu0 0
    %240 = vmatprep.subr.bf16.mxu0 0
    %241 = vmatpush1.bf16.msra.mxu0 0
    %242 = vmatprep.subr.bf16.mxu0 0
    %243 = vmatpush1.bf16.msra.mxu0 0
    %244 = vmatprep.subr.bf16.mxu0 0
    %245 = vmatpush1.bf16.msra.mxu0 0
    %246 = vmatprep.subr.bf16.mxu0 0
    %247 = vmatpush1.bf16.msra.mxu0 0
    %248 = vmatprep.subr.bf16.mxu0 0
    %249 = vmatpush1.bf16.msra.mxu0 0
    %250 = vmatprep.subr.bf16.mxu0 0
    %251 = vmatpush1.bf16.msra.mxu0 0
    %252 = vmatprep.mubr.bf16.mxu0 0
    %253 = vmatmul.mubr.bf16.gmra.mrb[0].mxu0 %v218
    %v254 = vpop.f32.mrb[0].mxu0
    %v255 = vadd.f32 %v203, %v254
    %v256 = vpop.f32.mrb[0].mxu0
    %v257 = vpop.f32.mrb[0].mxu0
    %v258 = vadd.f32 %v203, %v257
    %v259 = vpop.f32.mrb[0].mxu0
    %260 = vdwg.mxu0
    %v261 = vld [vmem:[#allocation11] sm:$0xf]
    %v262 = vld [vmem:[#allocation11 + $0x4] sm:$0xf]
    %v263 = vld [vmem:[#allocation11 + $0x8] sm:$0xf]
    %v264 = vld [vmem:[#allocation11 + $0xc] sm:$0xf]
    %v265 = vld [vmem:[#allocation13] sm:$0x1]
    %v267 = vlaneseq
    %v268 = vshrl.u32 %v267, 7
    %v269 = vsub.s32 0, %v268
    %v270 = vrot.slane %v265, %v269
    %v276 = vunpack.c.l.b16 %v261
    %v277 = vunpack.c.l.b16 %v262
    %v278 = vunpack.c.l.b16 %v263
    %v279 = vunpack.c.l.b16 %v264
    %v280 = vpack.c.b16 %v277, %v276
    %v281 = vpack.c.b16 %v279, %v278
    %284 = vmatprep.subr.bf16.mxu0 0
    %285 = vmatpush1.bf16.msra.mxu0 %v280
    %286 = vmatprep.subr.bf16.mxu0 0
    %287 = vmatpush1.bf16.msra.mxu0 %v281
    %288 = vmatprep.subr.bf16.mxu0 0
    %289 = vmatpush1.bf16.msra.mxu0 0
    %290 = vmatprep.subr.bf16.mxu0 0
    %291 = vmatpush1.bf16.msra.mxu0 0
    %292 = vmatprep.subr.bf16.mxu0 0
    %293 = vmatpush1.bf16.msra.mxu0 0
    %294 = vmatprep.subr.bf16.mxu0 0
    %295 = vmatpush1.bf16.msra.mxu0 0
    %296 = vmatprep.subr.bf16.mxu0 0
    %297 = vmatpush1.bf16.msra.mxu0 0
    %298 = vmatprep.subr.bf16.mxu0 0
    %299 = vmatpush1.bf16.msra.mxu0 0
    %300 = vmatprep.subr.bf16.mxu0 0
    %301 = vmatpush1.bf16.msra.mxu0 0
    %302 = vmatprep.subr.bf16.mxu0 0
    %303 = vmatpush1.bf16.msra.mxu0 0
    %304 = vmatprep.subr.bf16.mxu0 0
    %305 = vmatpush1.bf16.msra.mxu0 0
    %306 = vmatprep.subr.bf16.mxu0 0
    %307 = vmatpush1.bf16.msra.mxu0 0
    %308 = vmatprep.subr.bf16.mxu0 0
    %309 = vmatpush1.bf16.msra.mxu0 0
    %310 = vmatprep.subr.bf16.mxu0 0
    %311 = vmatpush1.bf16.msra.mxu0 0
    %312 = vmatprep.subr.bf16.mxu0 0
    %313 = vmatpush1.bf16.msra.mxu0 0
    %314 = vmatprep.subr.bf16.mxu0 0
    %315 = vmatpush1.bf16.msra.mxu0 0
    %316 = vmatprep.mubr.bf16.mxu0 0
    %317 = vmatmul.mubr.bf16.gmra.mrb[0].mxu0 %v218
    %v318 = vpop.f32.mrb[0].mxu0
    %v319 = vadd.f32 %v270, %v318
    %v320 = vpop.f32.mrb[0].mxu0
    %v321 = vpop.f32.mrb[0].mxu0
    %v322 = vadd.f32 %v270, %v321
    %v323 = vpop.f32.mrb[0].mxu0
    %324 = vdwg.mxu0
    %v325 = vpack.c.bf16 %v258, %v255
    %v327 = vunpack.c.l.b16 %v325
    %v328 = vunpack.c.h.b16 %v325
    %v329 = vpack.c.b16 %v327, %v327
    %v330 = vpack.c.b16 %v328, %v328
    %vm333 = vcmask 257024
    %334 = vst.msk [vmem:[#allocation14] sm:$0xf] %vm333, %v329
    %335 = vst.msk [vmem:[#allocation14 + $0x4] sm:$0xf] %vm333, %v330
    %v336 = vpack.c.bf16 %v322, %v319
    %v338 = vunpack.c.l.b16 %v336
    %v339 = vunpack.c.h.b16 %v336
    %v340 = vpack.c.b16 %v338, %v338
    %v341 = vpack.c.b16 %v339, %v339
    %344 = vst.msk [vmem:[#allocation15] sm:$0xf] %vm333, %v340
    %345 = vst.msk [vmem:[#allocation15 + $0x4] sm:$0xf] %vm333, %v341
    // Predicated region
    $region58: #{tpu_custom_call.1} parent=1 // pred_check
      _
    $region59: #{tpu_custom_call.1} parent=1 // pred_check_branch
      %347 = sbr.rel (0) target = $region61
    $region60: #{tpu_custom_call.1} parent=1 // pred_region
      %s349 = ssub.s32 128, 128
      %350 = vsyncadd [#allocation4], %s349
      %s351 = sshll.u32 [#allocation14], 4
      %s352 = int_to_ptr.vmem [resolvable:$true] %s351
      %357 = dma.vmem_to_hbm [thread:$0]  %s352, 128, %s7, [#allocation4], 64, 64, 4
    $region61: #{tpu_custom_call.1} parent=1 // pred_fallthru
      _
    // Predicated region
    $region62: #{tpu_custom_call.1} parent=1 // pred_check
      _
    $region63: #{tpu_custom_call.1} parent=1 // pred_check_branch
      %359 = sbr.rel (0) target = $region65
    $region64: #{tpu_custom_call.1} parent=1 // pred_region
      %s361 = ssub.s32 128, 128
      %362 = vsyncadd [#allocation16], %s361
      %s363 = sshll.u32 [#allocation15], 4
      %s364 = int_to_ptr.vmem [resolvable:$true] %s363
      %369 = dma.vmem_to_hbm [thread:$0]  %s364, 128, %s8, [#allocation16], 64, 64, 4
    $region65: #{tpu_custom_call.1} parent=1 // pred_fallthru
      _
    // Predicated region
    $region66: #{tpu_custom_call.1} parent=1 // pred_check
      _
    $region67: #{tpu_custom_call.1} parent=1 // pred_check_branch
      %371 = sbr.rel (0) target = $region69
    $region68: #{tpu_custom_call.1} parent=1 // pred_region
      %372 = dma.done [#allocation4], 128
    $region69: #{tpu_custom_call.1} parent=1 // pred_fallthru
      _
    // Predicated region
    $region70: #{tpu_custom_call.1} parent=1 // pred_check
      _
    $region71: #{tpu_custom_call.1} parent=1 // pred_check_branch
      %374 = sbr.rel (0) target = $region73
    $region72: #{tpu_custom_call.1} parent=1 // pred_region
      %375 = dma.done [#allocation16], 128
    $region73: #{tpu_custom_call.1} parent=1 // pred_fallthru
      _
    %376 = vsyncpa [#allocation3], 1
    %377 = vsyncpa [#allocation6], 1
    %378 = vsyncpa [#allocation9], 1
    %379 = vsyncpa [#allocation12], 1
    %380 = vsyncpa [#allocation4], 1
    %381 = vsyncpa [#allocation16], 1

</llo_original>
